<compile_context>
chip_gen: v5e
topology: v5e:2x2
jax: 0.10.0
libtpu: 0.0.40
codegen_flags: <defaults>
</compile_context>

<pallas_src>
import jax
import jax.numpy as jnp
from jax.experimental import pallas as pl
from jax.experimental.pallas import tpu as pltpu

LANE = 128      # TPU lane width
SUBLANE = 8     # f32 sublane tile


# ----------------------------------------------------------------------------
# Fused greedy-decode kernel: one grid step == one generated token.
#   pooled  = running_sum / running_count        (VPU + exact EUP reciprocal)
#   logits  = pooled_bf16 @ W_bf16               (MXU, f32 accumulate)
#   next    = argmax(logits, -1)                 (XLU reduction)
#   running_sum += one_hot(next) @ E             (MXU, incremental update)
# ----------------------------------------------------------------------------
def _decode_kernel(sum0_ref, cnt0_ref, emb_ref, w_ref, gen_ref, sum_sc, cnt_sc):
    t = pl.program_id(0)
    BP, _ = sum_sc.shape
    V = emb_ref.shape[0]

    # --- step 0: load the wrapper-computed prompt pooled-sum / token count ---
    @pl.when(t == 0)
    def _init():
        sum_sc[...] = sum0_ref[...]
        cnt_sc[...] = cnt0_ref[...]

    # --- pooled mean -> logits -> greedy argmax ------------------------------
    # Exact reciprocal (approx=False) so the mean matches a reference
    # mean-pool decode on near-tied logits; EUP slot is idle anyway.
    inv_n = pl.reciprocal(jnp.maximum(cnt_sc[...], 1.0))             # [BP,1]
    pooled = (sum_sc[...] * inv_n).astype(jnp.bfloat16)              # [BP,H]
    logits = jnp.dot(pooled, w_ref[...],
                     preferred_element_type=jnp.float32)             # [BP,V]
    nxt = jnp.argmax(logits, axis=-1).astype(jnp.int32)[:, None]     # [BP,1]

    # --- lane-dense store into the VMEM-resident output block ---------------
    gen_ref[t] = jnp.broadcast_to(nxt, (BP, LANE))

    # --- incremental update: sum += E[next], count += 1 ----------------------
    # TODO(synk): at realistic V this one-hot matmul costs the same MXU flops
    # as the logits matmul; replace with an SMEM-index gather of E rows
    # (write nxt to SMEM, BP dynamic sublane-row loads).  Kept as a matmul
    # here because at BP=8 / toy V the step is launch/latency-bound.
    iota_v = jax.lax.broadcasted_iota(jnp.int32, (1, V), 1)          # [1,V]
    onehot = (nxt == iota_v).astype(jnp.bfloat16)                    # [BP,V]
    sum_sc[...] = sum_sc[...] + jnp.dot(onehot, emb_ref[...],
                                        preferred_element_type=jnp.float32)
    cnt_sc[...] = cnt_sc[...] + 1.0


# ----------------------------------------------------------------------------
# pallas_call builder.  Constant-index_map blocks are requested single-buffered
# (pl.Buffered(1)) -- halves the resident-weight VMEM footprint; a fallback to
# default double buffering is used if the runtime rejects it.
# ----------------------------------------------------------------------------
def _build_decode_call(BP, H, V, max_new_tokens, single_buffer):
    resident = dict(pipeline_mode=pl.Buffered(1)) if single_buffer else {}
    in_specs = [
        pl.BlockSpec((BP, H), lambda t: (0, 0), **resident),   # prompt pooled sum
        pl.BlockSpec((BP, 1), lambda t: (0, 0), **resident),   # prompt token count
        pl.BlockSpec((V, H), lambda t: (0, 0), **resident),    # embedding table
        pl.BlockSpec((H, V), lambda t: (0, 0), **resident),    # output projection
    ]
    return pl.pallas_call(
        _decode_kernel,
        out_shape=jax.ShapeDtypeStruct((max_new_tokens, BP, LANE), jnp.int32),
        grid_spec=pltpu.PrefetchScalarGridSpec(
            num_scalar_prefetch=0,
            grid=(max_new_tokens,),
            in_specs=in_specs,
            # Resident output block: rows written in VMEM each step, single
            # HBM writeback at the end of the decode loop.
            out_specs=pl.BlockSpec((max_new_tokens, BP, LANE),
                                   lambda t: (0, 0, 0)),
            scratch_shapes=[
                pltpu.VMEM((BP, H), jnp.float32),   # running pooled sum
                pltpu.VMEM((BP, 1), jnp.float32),   # running token count
            ],
        ),
        compiler_params=pltpu.CompilerParams(
            dimension_semantics=("arbitrary",),     # sequential decode steps
            # 32 MiB scoped VMEM is ample here and legal on v5e/v6e/v7x.
            # Raise on v5e/v6e (128 MiB physical) to keep large weights
            # resident; on v7x (64 MiB) stream the vocab axis instead.
            vmem_limit_bytes=32 * 1024 * 1024,
        ),
    )


_DECODE_CACHE = {}


def _run_decode(sum0, cnt0, emb_bf16, w_bf16, max_new_tokens):
    BP, H = sum0.shape
    V = emb_bf16.shape[0]
    key = (BP, H, V, max_new_tokens)
    fn = _DECODE_CACHE.get(key)
    if fn is not None:
        return fn(sum0, cnt0, emb_bf16, w_bf16)
    err = None
    for single_buffer in (True, False):
        try:
            fn = _build_decode_call(BP, H, V, max_new_tokens, single_buffer)
            out = jax.block_until_ready(fn(sum0, cnt0, emb_bf16, w_bf16))
        except Exception as e:   # pl.Buffered(1) unsupported -> double-buffer
            err = e
            continue
        _DECODE_CACHE[key] = fn
        return out
    raise err


# ----------------------------------------------------------------------------
# Wrapper mimicking WrapCallModule.forward(**generate_kwargs)
# ----------------------------------------------------------------------------
def wrap_call_forward(generate_kwargs, embed_table, w_out, max_new_tokens=4):
    # torch.cat(list, 0): arbitrary-length list of per-sample tensors.
    input_ids = jnp.concatenate(
        list(generate_kwargs["input_ids"]), axis=0).astype(jnp.int32)
    attention_mask = jnp.concatenate(
        list(generate_kwargs["attention_mask"]), axis=0).astype(jnp.int32)

    B, S = input_ids.shape
    V, H = embed_table.shape
    BP = max(SUBLANE, -(-B // SUBLANE) * SUBLANE)   # pad batch to sublane tile

    ids_pad = jnp.zeros((BP, S), jnp.int32).at[:B].set(input_ids)
    mask_pad = jnp.zeros((BP, S), jnp.float32).at[:B].set(
        attention_mask.astype(jnp.float32))

    emb_bf16 = embed_table.astype(jnp.bfloat16)     # MXU-native operand dtype
    w_bf16 = w_out.astype(jnp.bfloat16)

    # Hoisted prompt pooling (perf-review item): exact f32 masked sum of bf16
    # embedding rows -- matches the in-kernel bf16-row / f32-accumulate update
    # and removes both the [BP,S,V] one-hot blob and the bf16 count rounding.
    tok_emb = jnp.take(emb_bf16, ids_pad, axis=0).astype(jnp.float32)  # [BP,S,H]
    sum0 = jnp.sum(tok_emb * mask_pad[:, :, None], axis=1)             # [BP,H]
    cnt0 = jnp.sum(mask_pad, axis=1, keepdims=True)                    # [BP,1]

    gen_slab = _run_decode(sum0, cnt0, emb_bf16, w_bf16, max_new_tokens)
    gen_tokens = gen_slab[:, :B, 0].T                                  # [B, max_new]

    # model.generate returns prompt + generated tokens.
    return jnp.concatenate([input_ids, gen_tokens], axis=1)


if __name__ == "__main__":
    key = jax.random.PRNGKey(0)
    k_ids0, k_ids1, k_emb, k_w = jax.random.split(key, 4)

    VOCAB, HIDDEN, SEQ = 128, 128, 8
    MAX_NEW = 4

    # Deterministic synthetic "model" parameters (bf16 MXU operands).
    embed_table = (jax.random.normal(k_emb, (VOCAB, HIDDEN), jnp.float32) * 0.02
                   ).astype(jnp.bfloat16)
    w_out = (jax.random.normal(k_w, (HIDDEN, VOCAB), jnp.float32) * 0.02
             ).astype(jnp.bfloat16)

    # WrapCallModule receives *lists* of per-sample tensors to concatenate.
    input_ids_batch = (
        jax.random.randint(k_ids0, (1, SEQ), 0, VOCAB, jnp.int32),
        jax.random.randint(k_ids1, (1, SEQ), 0, VOCAB, jnp.int32),
    )
    attention_mask_batch = (
        jnp.ones((1, SEQ), jnp.int32),
        jnp.ones((1, SEQ), jnp.int32),
    )
    generate_kwargs = {
        "input_ids": input_ids_batch,
        "attention_mask": attention_mask_batch,
    }

    out = wrap_call_forward(generate_kwargs, embed_table, w_out,
                            max_new_tokens=MAX_NEW)
    out = jax.block_until_ready(out)

    B = sum(x.shape[0] for x in input_ids_batch)
    assert out.shape == (B, SEQ + MAX_NEW) and out.dtype == jnp.int32
    prompt = jnp.concatenate(list(input_ids_batch), axis=0)
    assert bool(jnp.all(out[:, :SEQ] == prompt))                 # prompt preserved
    assert bool(jnp.all((out[:, SEQ:] >= 0) & (out[:, SEQ:] < VOCAB)))
    print("KERNEL_OK")
</pallas_src>

<mosaic_0001>
module attributes {stable_mosaic.version = 11 : i64} {
  func.func @_decode_kernel(%arg0: i32, %arg1: memref<8x128xf32, #tpu.memory_space<vmem>>, %arg2: memref<8x1xf32, #tpu.memory_space<vmem>>, %arg3: memref<128x128xbf16, #tpu.memory_space<vmem>>, %arg4: memref<128x128xbf16, #tpu.memory_space<vmem>>, %arg5: memref<4x8x128xi32, #tpu.memory_space<vmem>>, %arg6: memref<8x128xf32, #tpu.memory_space<vmem>>, %arg7: memref<8x1xf32, #tpu.memory_space<vmem>>) attributes {dimension_semantics = [#tpu.dimension_semantics<arbitrary>], iteration_bounds = array<i64: 4>, scalar_prefetch = 0 : i64, scratch_operands = 2 : i64, tpu.core_type = #tpu.core_type<tc>, window_params = [{pipeline_mode = #tpu.pipeline_mode<synchronous>, transform_indices = @transform_0, window_bounds = array<i64: 8, 128>}, {pipeline_mode = #tpu.pipeline_mode<synchronous>, transform_indices = @transform_1, window_bounds = array<i64: 8, 1>}, {pipeline_mode = #tpu.pipeline_mode<synchronous>, transform_indices = @transform_2, window_bounds = array<i64: 128, 128>}, {pipeline_mode = #tpu.pipeline_mode<synchronous>, transform_indices = @transform_3, window_bounds = array<i64: 128, 128>}, {pipeline_mode = #tpu.pipeline_mode<synchronous>, transform_indices = @transform_4, window_bounds = array<i64: 4, 8, 128>}]} {
    %c0_i32 = arith.constant 0 : i32
    %0 = arith.cmpi eq, %arg0, %c0_i32 : i32
    %1 = arith.extui %0 : i1 to i32
    %c0_i32_0 = arith.constant 0 : i32
    %2 = arith.cmpi ne, %1, %c0_i32_0 : i32
    scf.if %2 {
      %c0_21 = arith.constant 0 : index
      %c0_22 = arith.constant 0 : index
      %37 = vector.load %arg1[%c0_21, %c0_22] : memref<8x128xf32, #tpu.memory_space<vmem>>, vector<8x128xf32>
      %c0_23 = arith.constant 0 : index
      %c0_24 = arith.constant 0 : index
      %38 = vector.load %arg6[%c0_23, %c0_24] : memref<8x128xf32, #tpu.memory_space<vmem>>, vector<8x128xf32>
      tpu.vector_store %arg6[%c0_23, %c0_24], %37 {strides = array<i32>} : memref<8x128xf32, #tpu.memory_space<vmem>>, vector<8x128xf32>,
      %c0_25 = arith.constant 0 : index
      %c0_26 = arith.constant 0 : index
      %39 = vector.load %arg2[%c0_25, %c0_26] : memref<8x1xf32, #tpu.memory_space<vmem>>, vector<8x1xf32>
      %c0_27 = arith.constant 0 : index
      %c0_28 = arith.constant 0 : index
      %40 = vector.load %arg7[%c0_27, %c0_28] : memref<8x1xf32, #tpu.memory_space<vmem>>, vector<8x1xf32>
      tpu.vector_store %arg7[%c0_27, %c0_28], %39 {strides = array<i32>} : memref<8x1xf32, #tpu.memory_space<vmem>>, vector<8x1xf32>,
    } else {
    }
    %c0 = arith.constant 0 : index
    %c0_1 = arith.constant 0 : index
    %3 = vector.load %arg7[%c0, %c0_1] : memref<8x1xf32, #tpu.memory_space<vmem>>, vector<8x1xf32>
    %cst = arith.constant 1.000000e+00 : f32
    %4 = vector.broadcast %cst : f32 to vector<8x1xf32>
    %5 = arith.maximumf %3, %4 : vector<8x1xf32>
    %6 = tpu.reciprocal %5 : vector<8x1xf32> -> vector<8x1xf32>
    %c0_2 = arith.constant 0 : index
    %c0_3 = arith.constant 0 : index
    %7 = vector.load %arg6[%c0_2, %c0_3] : memref<8x128xf32, #tpu.memory_space<vmem>>, vector<8x128xf32>
    %8 = vector.broadcast %6 : vector<8x1xf32> to vector<8x128xf32>
    %9 = arith.mulf %7, %8 : vector<8x128xf32>
    %10 = arith.truncf %9 : vector<8x128xf32> to vector<8x128xbf16>
    %c0_4 = arith.constant 0 : index
    %c0_5 = arith.constant 0 : index
    %11 = vector.load %arg4[%c0_4, %c0_5] : memref<128x128xbf16, #tpu.memory_space<vmem>>, vector<128x128xbf16>
    %cst_6 = arith.constant dense<0.000000e+00> : vector<8x128xf32>
    %12 = tpu.matmul %10, %11, %cst_6 {dimension_numbers = #tpu.dot_dimension_numbers<[1], [0], [0], [1], [0, 0, 1, 1], [], []>} : vector<8x128xbf16>, vector<128x128xbf16>, vector<8x128xf32> -> vector<8x128xf32>
    %13 = tpu.reduce_index %12 {axis = 1 : i32, kind = #tpu.reduction_kind<arg_max>} : vector<8x128xf32> -> vector<8xi32>
    %14 = vector.shape_cast %13 : vector<8xi32> to vector<8x1xi32>
    %15 = vector.shape_cast %14 : vector<8x1xi32> to vector<8x1xi32>
    %16 = vector.broadcast %15 : vector<8x1xi32> to vector<8x128xi32>
    %17 = arith.index_cast %arg0 : i32 to index
    %c0_7 = arith.constant 0 : index
    %c0_8 = arith.constant 0 : index
    %18 = vector.load %arg5[%17, %c0_7, %c0_8] : memref<4x8x128xi32, #tpu.memory_space<vmem>>, vector<1x8x128xi32>
    %19 = vector.shape_cast %18 : vector<1x8x128xi32> to vector<8x128xi32>
    %20 = vector.shape_cast %16 : vector<8x128xi32> to vector<1x8x128xi32>
    tpu.vector_store %arg5[%17, %c0_7, %c0_8], %20 {strides = array<i32>} : memref<4x8x128xi32, #tpu.memory_space<vmem>>, vector<1x8x128xi32>,
    %21 = tpu.iota {dimensions = array<i32: 1>} : vector<1x128xi32>
    %22 = vector.broadcast %14 : vector<8x1xi32> to vector<8x128xi32>
    %23 = vector.broadcast %21 : vector<1x128xi32> to vector<8x128xi32>
    %24 = arith.cmpi eq, %22, %23 : vector<8x128xi32>
    %25 = arith.extui %24 : vector<8x128xi1> to vector<8x128xi32>
    %26 = arith.sitofp %25 : vector<8x128xi32> to vector<8x128xf32>
    %27 = arith.truncf %26 : vector<8x128xf32> to vector<8x128xbf16>
    %c0_9 = arith.constant 0 : index
    %c0_10 = arith.constant 0 : index
    %28 = vector.load %arg6[%c0_9, %c0_10] : memref<8x128xf32, #tpu.memory_space<vmem>>, vector<8x128xf32>
    %c0_11 = arith.constant 0 : index
    %c0_12 = arith.constant 0 : index
    %29 = vector.load %arg3[%c0_11, %c0_12] : memref<128x128xbf16, #tpu.memory_space<vmem>>, vector<128x128xbf16>
    %cst_13 = arith.constant dense<0.000000e+00> : vector<8x128xf32>
    %30 = tpu.matmul %27, %29, %cst_13 {dimension_numbers = #tpu.dot_dimension_numbers<[1], [0], [0], [1], [0, 0, 1, 1], [], []>} : vector<8x128xbf16>, vector<128x128xbf16>, vector<8x128xf32> -> vector<8x128xf32>
    %31 = arith.addf %28, %30 : vector<8x128xf32>
    %c0_14 = arith.constant 0 : index
    %c0_15 = arith.constant 0 : index
    %32 = vector.load %arg6[%c0_14, %c0_15] : memref<8x128xf32, #tpu.memory_space<vmem>>, vector<8x128xf32>
    tpu.vector_store %arg6[%c0_14, %c0_15], %31 {strides = array<i32>} : memref<8x128xf32, #tpu.memory_space<vmem>>, vector<8x128xf32>,
    %c0_16 = arith.constant 0 : index
    %c0_17 = arith.constant 0 : index
    %33 = vector.load %arg7[%c0_16, %c0_17] : memref<8x1xf32, #tpu.memory_space<vmem>>, vector<8x1xf32>
    %cst_18 = arith.constant 1.000000e+00 : f32
    %34 = vector.broadcast %cst_18 : f32 to vector<8x1xf32>
    %35 = arith.addf %33, %34 : vector<8x1xf32>
    %c0_19 = arith.constant 0 : index
    %c0_20 = arith.constant 0 : index
    %36 = vector.load %arg7[%c0_19, %c0_20] : memref<8x1xf32, #tpu.memory_space<vmem>>, vector<8x1xf32>
    tpu.vector_store %arg7[%c0_19, %c0_20], %35 {strides = array<i32>} : memref<8x1xf32, #tpu.memory_space<vmem>>, vector<8x1xf32>,
    return
  }
  func.func @transform_0(%arg0: i32) -> (i32, i32) {
    %c0_i32 = arith.constant 0 : i32
    %c0_i32_0 = arith.constant 0 : i32
    %c0_i32_1 = arith.constant 0 : i32
    return %c0_i32, %c0_i32_0 : i32, i32
  }
  func.func @transform_1(%arg0: i32) -> (i32, i32) {
    %c0_i32 = arith.constant 0 : i32
    %c0_i32_0 = arith.constant 0 : i32
    %c0_i32_1 = arith.constant 0 : i32
    return %c0_i32, %c0_i32_0 : i32, i32
  }
  func.func @transform_2(%arg0: i32) -> (i32, i32) {
    %c0_i32 = arith.constant 0 : i32
    %c0_i32_0 = arith.constant 0 : i32
    %c0_i32_1 = arith.constant 0 : i32
    return %c0_i32, %c0_i32_0 : i32, i32
  }
  func.func @transform_3(%arg0: i32) -> (i32, i32) {
    %c0_i32 = arith.constant 0 : i32
    %c0_i32_0 = arith.constant 0 : i32
    %c0_i32_1 = arith.constant 0 : i32
    return %c0_i32, %c0_i32_0 : i32, i32
  }
  func.func @transform_4(%arg0: i32) -> (i32, i32, i32) {
    %c0_i32 = arith.constant 0 : i32
    %c0_i32_0 = arith.constant 0 : i32
    %c0_i32_1 = arith.constant 0 : i32
    %c0_i32_2 = arith.constant 0 : i32
    return %c0_i32, %c0_i32_0, %c0_i32_1 : i32, i32, i32
  }
}

module attributes {stable_mosaic.version = 11 : i64} {
  func.func @_decode_kernel(%arg0: i32, %arg1: memref<8x128xf32, #tpu.memory_space<vmem>>, %arg2: memref<8x1xf32, #tpu.memory_space<vmem>>, %arg3: memref<128x128xbf16, #tpu.memory_space<vmem>>, %arg4: memref<128x128xbf16, #tpu.memory_space<vmem>>, %arg5: memref<4x8x128xi32, #tpu.memory_space<vmem>>, %arg6: memref<8x128xf32, #tpu.memory_space<vmem>>, %arg7: memref<8x1xf32, #tpu.memory_space<vmem>>) attributes {dimension_semantics = [#tpu.dimension_semantics<arbitrary>], iteration_bounds = array<i64: 4>, scalar_prefetch = 0 : i64, scratch_operands = 2 : i64, tpu.core_type = #tpu.core_type<tc>, window_params = [{pipeline_mode = #tpu.pipeline_mode<synchronous>, transform_indices = @transform_0, window_bounds = array<i64: 8, 128>}, {pipeline_mode = #tpu.pipeline_mode<synchronous>, transform_indices = @transform_1, window_bounds = array<i64: 8, 1>}, {pipeline_mode = #tpu.pipeline_mode<synchronous>, transform_indices = @transform_2, window_bounds = array<i64: 128, 128>}, {pipeline_mode = #tpu.pipeline_mode<synchronous>, transform_indices = @transform_3, window_bounds = array<i64: 128, 128>}, {pipeline_mode = #tpu.pipeline_mode<synchronous>, transform_indices = @transform_4, window_bounds = array<i64: 4, 8, 128>}]} {
    %c0_i32 = arith.constant 0 : i32
    %0 = arith.cmpi eq, %arg0, %c0_i32 : i32
    %1 = arith.extui %0 : i1 to i32
    %c0_i32_0 = arith.constant 0 : i32
    %2 = arith.cmpi ne, %1, %c0_i32_0 : i32
    scf.if %2 {
      %c0_21 = arith.constant 0 : index
      %c0_22 = arith.constant 0 : index
      %37 = vector.load %arg1[%c0_21, %c0_22] : memref<8x128xf32, #tpu.memory_space<vmem>>, vector<8x128xf32>
      %c0_23 = arith.constant 0 : index
      %c0_24 = arith.constant 0 : index
      %38 = vector.load %arg6[%c0_23, %c0_24] : memref<8x128xf32, #tpu.memory_space<vmem>>, vector<8x128xf32>
      tpu.vector_store %arg6[%c0_23, %c0_24], %37 {strides = array<i32>} : memref<8x128xf32, #tpu.memory_space<vmem>>, vector<8x128xf32>,
      %c0_25 = arith.constant 0 : index
      %c0_26 = arith.constant 0 : index
      %39 = vector.load %arg2[%c0_25, %c0_26] : memref<8x1xf32, #tpu.memory_space<vmem>>, vector<8x1xf32>
      %c0_27 = arith.constant 0 : index
      %c0_28 = arith.constant 0 : index
      %40 = vector.load %arg7[%c0_27, %c0_28] : memref<8x1xf32, #tpu.memory_space<vmem>>, vector<8x1xf32>
      tpu.vector_store %arg7[%c0_27, %c0_28], %39 {strides = array<i32>} : memref<8x1xf32, #tpu.memory_space<vmem>>, vector<8x1xf32>,
    } else {
    }
    %c0 = arith.constant 0 : index
    %c0_1 = arith.constant 0 : index
    %3 = vector.load %arg7[%c0, %c0_1] : memref<8x1xf32, #tpu.memory_space<vmem>>, vector<8x1xf32>
    %cst = arith.constant 1.000000e+00 : f32
    %4 = vector.broadcast %cst : f32 to vector<8x1xf32>
    %5 = arith.maximumf %3, %4 : vector<8x1xf32>
    %6 = tpu.reciprocal %5 : vector<8x1xf32> -> vector<8x1xf32>
    %c0_2 = arith.constant 0 : index
    %c0_3 = arith.constant 0 : index
    %7 = vector.load %arg6[%c0_2, %c0_3] : memref<8x128xf32, #tpu.memory_space<vmem>>, vector<8x128xf32>
    %8 = vector.broadcast %6 : vector<8x1xf32> to vector<8x128xf32>
    %9 = arith.mulf %7, %8 : vector<8x128xf32>
    %10 = arith.truncf %9 : vector<8x128xf32> to vector<8x128xbf16>
    %c0_4 = arith.constant 0 : index
    %c0_5 = arith.constant 0 : index
    %11 = vector.load %arg4[%c0_4, %c0_5] : memref<128x128xbf16, #tpu.memory_space<vmem>>, vector<128x128xbf16>
    %cst_6 = arith.constant dense<0.000000e+00> : vector<8x128xf32>
    %12 = tpu.matmul %10, %11, %cst_6 {dimension_numbers = #tpu.dot_dimension_numbers<[1], [0], [0], [1], [0, 0, 1, 1], [], []>} : vector<8x128xbf16>, vector<128x128xbf16>, vector<8x128xf32> -> vector<8x128xf32>
    %13 = tpu.reduce_index %12 {axis = 1 : i32, kind = #tpu.reduction_kind<arg_max>} : vector<8x128xf32> -> vector<8xi32>
    %14 = vector.shape_cast %13 : vector<8xi32> to vector<8x1xi32>
    %15 = vector.shape_cast %14 : vector<8x1xi32> to vector<8x1xi32>
    %16 = vector.broadcast %15 : vector<8x1xi32> to vector<8x128xi32>
    %17 = arith.index_cast %arg0 : i32 to index
    %c0_7 = arith.constant 0 : index
    %c0_8 = arith.constant 0 : index
    %18 = vector.load %arg5[%17, %c0_7, %c0_8] : memref<4x8x128xi32, #tpu.memory_space<vmem>>, vector<1x8x128xi32>
    %19 = vector.shape_cast %18 : vector<1x8x128xi32> to vector<8x128xi32>
    %20 = vector.shape_cast %16 : vector<8x128xi32> to vector<1x8x128xi32>
    tpu.vector_store %arg5[%17, %c0_7, %c0_8], %20 {strides = array<i32>} : memref<4x8x128xi32, #tpu.memory_space<vmem>>, vector<1x8x128xi32>,
    %21 = tpu.iota {dimensions = array<i32: 1>} : vector<1x128xi32>
    %22 = vector.broadcast %14 : vector<8x1xi32> to vector<8x128xi32>
    %23 = vector.broadcast %21 : vector<1x128xi32> to vector<8x128xi32>
    %24 = arith.cmpi eq, %22, %23 : vector<8x128xi32>
    %25 = arith.extui %24 : vector<8x128xi1> to vector<8x128xi32>
    %26 = arith.sitofp %25 : vector<8x128xi32> to vector<8x128xf32>
    %27 = arith.truncf %26 : vector<8x128xf32> to vector<8x128xbf16>
    %c0_9 = arith.constant 0 : index
    %c0_10 = arith.constant 0 : index
    %28 = vector.load %arg6[%c0_9, %c0_10] : memref<8x128xf32, #tpu.memory_space<vmem>>, vector<8x128xf32>
    %c0_11 = arith.constant 0 : index
    %c0_12 = arith.constant 0 : index
    %29 = vector.load %arg3[%c0_11, %c0_12] : memref<128x128xbf16, #tpu.memory_space<vmem>>, vector<128x128xbf16>
    %cst_13 = arith.constant dense<0.000000e+00> : vector<8x128xf32>
    %30 = tpu.matmul %27, %29, %cst_13 {dimension_numbers = #tpu.dot_dimension_numbers<[1], [0], [0], [1], [0, 0, 1, 1], [], []>} : vector<8x128xbf16>, vector<128x128xbf16>, vector<8x128xf32> -> vector<8x128xf32>
    %31 = arith.addf %28, %30 : vector<8x128xf32>
    %c0_14 = arith.constant 0 : index
    %c0_15 = arith.constant 0 : index
    %32 = vector.load %arg6[%c0_14, %c0_15] : memref<8x128xf32, #tpu.memory_space<vmem>>, vector<8x128xf32>
    tpu.vector_store %arg6[%c0_14, %c0_15], %31 {strides = array<i32>} : memref<8x128xf32, #tpu.memory_space<vmem>>, vector<8x128xf32>,
    %c0_16 = arith.constant 0 : index
    %c0_17 = arith.constant 0 : index
    %33 = vector.load %arg7[%c0_16, %c0_17] : memref<8x1xf32, #tpu.memory_space<vmem>>, vector<8x1xf32>
    %cst_18 = arith.constant 1.000000e+00 : f32
    %34 = vector.broadcast %cst_18 : f32 to vector<8x1xf32>
    %35 = arith.addf %33, %34 : vector<8x1xf32>
    %c0_19 = arith.constant 0 : index
    %c0_20 = arith.constant 0 : index
    %36 = vector.load %arg7[%c0_19, %c0_20] : memref<8x1xf32, #tpu.memory_space<vmem>>, vector<8x1xf32>
    tpu.vector_store %arg7[%c0_19, %c0_20], %35 {strides = array<i32>} : memref<8x1xf32, #tpu.memory_space<vmem>>, vector<8x1xf32>,
    return
  }
  func.func @transform_0(%arg0: i32) -> (i32, i32) {
    %c0_i32 = arith.constant 0 : i32
    %c0_i32_0 = arith.constant 0 : i32
    %c0_i32_1 = arith.constant 0 : i32
    return %c0_i32, %c0_i32_0 : i32, i32
  }
  func.func @transform_1(%arg0: i32) -> (i32, i32) {
    %c0_i32 = arith.constant 0 : i32
    %c0_i32_0 = arith.constant 0 : i32
    %c0_i32_1 = arith.constant 0 : i32
    return %c0_i32, %c0_i32_0 : i32, i32
  }
  func.func @transform_2(%arg0: i32) -> (i32, i32) {
    %c0_i32 = arith.constant 0 : i32
    %c0_i32_0 = arith.constant 0 : i32
    %c0_i32_1 = arith.constant 0 : i32
    return %c0_i32, %c0_i32_0 : i32, i32
  }
  func.func @transform_3(%arg0: i32) -> (i32, i32) {
    %c0_i32 = arith.constant 0 : i32
    %c0_i32_0 = arith.constant 0 : i32
    %c0_i32_1 = arith.constant 0 : i32
    return %c0_i32, %c0_i32_0 : i32, i32
  }
  func.func @transform_4(%arg0: i32) -> (i32, i32, i32) {
    %c0_i32 = arith.constant 0 : i32
    %c0_i32_0 = arith.constant 0 : i32
    %c0_i32_1 = arith.constant 0 : i32
    %c0_i32_2 = arith.constant 0 : i32
    return %c0_i32, %c0_i32_0, %c0_i32_1 : i32, i32, i32
  }
}

</mosaic_0001>

<llo_original>
// kernel: tpu_custom_call.1
$region0: #{tpu_custom_call.1}
  #allocation0 [shape = 'u32[]', space=smem, size = 0x4, offset = 0x4, fixed_abs, tag = 'smem constant byte address 0x4 - core index']
  #allocation1 [shape = 'u32[72,128]{1,0:T(1,128)}', space=vmem, size = 0x9000, scoped, tag = 'internal scratch']
  #allocation2 [shape = 'f32[8,128]{1,0:T(8,128)}', space=vmem, size = 0x1000, scoped, tag = 'scratch operand']
  #allocation3 [shape = 'f32[8,1]{1,0:T(8,128)}', space=vmem, size = 0x1000, scoped, tag = 'scratch operand']
  %s0 = inlined_call_operand.vmem [shape: f32[8,128], index: 0, kind: input, shape index: {}]
  %s1 = inlined_call_operand.vmem [shape: f32[8,1], index: 1, kind: input, shape index: {}]
  %s2 = inlined_call_operand.hbm [shape: bf16[128,128], index: 2, kind: input, shape index: {}]
  %s3 = inlined_call_operand.hbm [shape: bf16[128,128], index: 3, kind: input, shape index: {}]
  %s4 = inlined_call_operand.hbm [shape: s32[4,8,128], index: 4, kind: output, shape index: {}]
  %s5 = sld [smem:[#allocation0]]
  $region61: #{tpu_custom_call.1} parent=0
    _
  %s7 = ssub.s32 1, %s5
  %s8 = scalar_select 0, %s7, %s5
  $region1: #{tpu_custom_call.1} parent=0
    #allocation4 [shape = 'u8[32768]{0}', space=vmem, size = 0x8000, scoped, tag = 'input window, operand 2, single buffered']
    #allocation5 [shape = 's32[2]{0}', space=sflag, size = 0x8, scoped, tag = 'scoped memory for tpu_custom_call.1']
    #allocation6 [shape = 's32[2]{0}', space=sflag, size = 0x8, scoped, tag = 'scoped memory for tpu_custom_call.1']
    #allocation7 [shape = 'u8[32768]{0}', space=vmem, size = 0x8000, scoped, tag = 'input window, operand 3, single buffered']
    #allocation8 [shape = 's32[1]{0}', space=sflag, size = 0x4, scoped, tag = 'scoped memory for tpu_custom_call.1']
    #allocation9 [shape = 'u8[16384]{0}', space=vmem, size = 0x4000, scoped, tag = 'output window, operand 0, single buffered']
    %9 = vsyncpa [#allocation5], 0
    %10 = vsyncpa [#allocation8], 0
    %11 = vsyncpa [#allocation6], 0
    loop: start=0, step=1, limit=6
    $region2: #{tpu_custom_call.1} parent=1 // loop_pre_header
      _
    $region3: #{tpu_custom_call.1} parent=1 // loop_header
      %s13 = sphi 0, %s17
      %p14 = scmp.ge.s32.totalorder %s13, 6
      %s21 = sphi 0, %s21
      %s23 = sphi 0, %s21
      %s24 = sphi 0, %s23
      %s38 = sphi 0, %s24
      %s42 = sphi 0, %s42
      %s44 = sphi 0, %s42
      %s45 = sphi 0, %s44
      %s59 = sphi 0, %s45
      %s63 = sphi 0, %s63
      %s65 = sphi 0, %s63
      %s66 = sphi 0, %s65
      %s80 = sphi 0, %s66
      %s84 = sphi 0, %s84
      %s86 = sphi 0, %s84
      %s87 = sphi 0, %s86
      %s101 = sphi 0, %s87
      %s105 = sphi 0, %s105
      %s107 = sphi 0, %s105
      %s108 = sphi 0, %s107
      %s122 = sphi 0, %s108
    $region4: #{tpu_custom_call.1} parent=1 // loop_header_branch
      %16 = sbr.rel (%p14) target = $region8
    $region5: #{tpu_custom_call.1} parent=1 // loop_body
      %s18 = ssub.s32 %s13, 1
      %s19 = ssub.s32 %s13, 2
      %s20 = sadd.s32 %s13, 1
      %s22 = sadd.s32 %s21, 1
      %p25 = scmp.eq.s32.totalorder %s13, 3
      %p26 = scmp.ne.s32.totalorder %s21, %s23
      %p27 = scmp.eq.s32.totalorder %s13, 0
      %p28 = por %p26, %p27
      %p29 = scmp.ne.s32.totalorder %s21, %s23
      %p30 = scmp.eq.s32.totalorder %s18, 3
      %p31 = por %p29, %p30
      %p32 = scmp.ne.s32.totalorder %s23, %s24
      %p33 = scmp.eq.s32.totalorder %s18, 0
      %p34 = por %p32, %p33
      %p35 = scmp.ne.s32.totalorder %s23, %s24
      %p36 = scmp.eq.s32.totalorder %s19, 3
      %p37 = por %p35, %p36
      %p39 = scmp.ne.s32.totalorder %s24, %s38
      %p40 = scmp.eq.s32.totalorder %s19, 0
      %p41 = por %p39, %p40
      %s43 = sadd.s32 %s42, 1
      %p46 = scmp.eq.s32.totalorder %s13, 3
      %p47 = scmp.ne.s32.totalorder %s42, %s44
      %p48 = scmp.eq.s32.totalorder %s13, 0
      %p49 = por %p47, %p48
      %p50 = scmp.ne.s32.totalorder %s42, %s44
      %p51 = scmp.eq.s32.totalorder %s18, 3
      %p52 = por %p50, %p51
      %p53 = scmp.ne.s32.totalorder %s44, %s45
      %p54 = scmp.eq.s32.totalorder %s18, 0
      %p55 = por %p53, %p54
      %p56 = scmp.ne.s32.totalorder %s44, %s45
      %p57 = scmp.eq.s32.totalorder %s19, 3
      %p58 = por %p56, %p57
      %p60 = scmp.ne.s32.totalorder %s45, %s59
      %p61 = scmp.eq.s32.totalorder %s19, 0
      %p62 = por %p60, %p61
      %s64 = sadd.s32 %s63, 1
      %p67 = scmp.eq.s32.totalorder %s13, 3
      %p68 = scmp.ne.s32.totalorder %s63, %s65
      %p69 = scmp.eq.s32.totalorder %s13, 0
      %p70 = por %p68, %p69
      %p71 = scmp.ne.s32.totalorder %s63, %s65
      %p72 = scmp.eq.s32.totalorder %s18, 3
      %p73 = por %p71, %p72
      %p74 = scmp.ne.s32.totalorder %s65, %s66
      %p75 = scmp.eq.s32.totalorder %s18, 0
      %p76 = por %p74, %p75
      %p77 = scmp.ne.s32.totalorder %s65, %s66
      %p78 = scmp.eq.s32.totalorder %s19, 3
      %p79 = por %p77, %p78
      %p81 = scmp.ne.s32.totalorder %s66, %s80
      %p82 = scmp.eq.s32.totalorder %s19, 0
      %p83 = por %p81, %p82
      %s85 = sadd.s32 %s84, 1
      %p88 = scmp.eq.s32.totalorder %s13, 3
      %p89 = scmp.ne.s32.totalorder %s84, %s86
      %p90 = scmp.eq.s32.totalorder %s13, 0
      %p91 = por %p89, %p90
      %p92 = scmp.ne.s32.totalorder %s84, %s86
      %p93 = scmp.eq.s32.totalorder %s18, 3
      %p94 = por %p92, %p93
      %p95 = scmp.ne.s32.totalorder %s86, %s87
      %p96 = scmp.eq.s32.totalorder %s18, 0
      %p97 = por %p95, %p96
      %p98 = scmp.ne.s32.totalorder %s86, %s87
      %p99 = scmp.eq.s32.totalorder %s19, 3
      %p100 = por %p98, %p99
      %p102 = scmp.ne.s32.totalorder %s87, %s101
      %p103 = scmp.eq.s32.totalorder %s19, 0
      %p104 = por %p102, %p103
      %s106 = sadd.s32 %s105, 1
      %p109 = scmp.eq.s32.totalorder %s13, 3
      %p110 = scmp.ne.s32.totalorder %s105, %s107
      %p111 = scmp.eq.s32.totalorder %s13, 0
      %p112 = por %p110, %p111
      %p113 = scmp.ne.s32.totalorder %s105, %s107
      %p114 = scmp.eq.s32.totalorder %s18, 3
      %p115 = por %p113, %p114
      %p116 = scmp.ne.s32.totalorder %s107, %s108
      %p117 = scmp.eq.s32.totalorder %s18, 0
      %p118 = por %p116, %p117
      %p119 = scmp.ne.s32.totalorder %s107, %s108
      %p120 = scmp.eq.s32.totalorder %s19, 3
      %p121 = por %p119, %p120
      %p123 = scmp.ne.s32.totalorder %s108, %s122
      %p124 = scmp.eq.s32.totalorder %s19, 0
      %p125 = por %p123, %p124
      %p126 = scmp.le.s32.totalorder 1, %s13
      %p127 = scmp.lt.s32.totalorder %s13, 5
      %p128 = pnand %p126, %p127
      %p129 = pneg %p128
      // Predicated region
      $region9: #{tpu_custom_call.1} parent=5 // pred_check
        _
      $region10: #{tpu_custom_call.1} parent=5 // pred_check_branch
        %131 = sbr.rel (%p128) target = $region12
      $region11: #{tpu_custom_call.1} parent=5 // pred_region
        %s132 = ssub.s32 %s13, 1
        // Predicated region
        $region13: #{tpu_custom_call.1} parent=11 // pred_check
          %p133 = pneg %p34
        $region14: #{tpu_custom_call.1} parent=11 // pred_check_branch
          %135 = sbr.rel (%p133) target = $region16
        $region15: #{tpu_custom_call.1} parent=11 // pred_region
          _
        $region16: #{tpu_custom_call.1} parent=11 // pred_fallthru
          _
        // Predicated region
        $region17: #{tpu_custom_call.1} parent=11 // pred_check
          %p136 = pneg %p55
        $region18: #{tpu_custom_call.1} parent=11 // pred_check_branch
          %138 = sbr.rel (%p136) target = $region20
        $region19: #{tpu_custom_call.1} parent=11 // pred_region
          _
        $region20: #{tpu_custom_call.1} parent=11 // pred_fallthru
          _
        // Predicated region
        $region21: #{tpu_custom_call.1} parent=11 // pred_check
          %p139 = pneg %p76
        $region22: #{tpu_custom_call.1} parent=11 // pred_check_branch
          %141 = sbr.rel (%p139) target = $region24
        $region23: #{tpu_custom_call.1} parent=11 // pred_region
          %143 = vsyncadd [#allocation5], 0
          %s144 = sshll.u32 %s2, 4
          %s145 = int_to_ptr.hbm [resolvable:$true] %s144
          %s146 = sshll.u32 [#allocation4], 4
          %s147 = int_to_ptr.vmem [resolvable:$true] %s146
          %152 = dma.hbm_to_vmem [thread:$0]  %s145, 1024, %s147, [#allocation5], 64, 64, 4
        $region24: #{tpu_custom_call.1} parent=11 // pred_fallthru
          _
        // Predicated region
        $region25: #{tpu_custom_call.1} parent=11 // pred_check
          %p153 = pneg %p97
        $region26: #{tpu_custom_call.1} parent=11 // pred_check_branch
          %155 = sbr.rel (%p153) target = $region28
        $region27: #{tpu_custom_call.1} parent=11 // pred_region
          %157 = vsyncadd [#allocation8], 0
          %s158 = sshll.u32 %s3, 4
          %s159 = int_to_ptr.hbm [resolvable:$true] %s158
          %s160 = sshll.u32 [#allocation7], 4
          %s161 = int_to_ptr.vmem [resolvable:$true] %s160
          %166 = dma.hbm_to_vmem [thread:$0]  %s159, 1024, %s161, [#allocation8], 64, 64, 4
        $region28: #{tpu_custom_call.1} parent=11 // pred_fallthru
          _
      $region12: #{tpu_custom_call.1} parent=5 // pred_fallthru
        _
      %p167 = scmp.lt.s32.totalorder %s13, 4
      // Predicated region
      $region29: #{tpu_custom_call.1} parent=5 // pred_check
        %p168 = pneg %p167
      $region30: #{tpu_custom_call.1} parent=5 // pred_check_branch
        %170 = sbr.rel (%p168) target = $region32
      $region31: #{tpu_custom_call.1} parent=5 // pred_region
        _
      $region32: #{tpu_custom_call.1} parent=5 // pred_fallthru
        _
      %p171 = scmp.le.s32.totalorder 1, %s13
      %p172 = scmp.lt.s32.totalorder %s13, 5
      %p173 = pnand %p171, %p172
      %p174 = pneg %p173
      // Predicated region
      $region33: #{tpu_custom_call.1} parent=5 // pred_check
        _
      $region34: #{tpu_custom_call.1} parent=5 // pred_check_branch
        %176 = sbr.rel (%p173) target = $region36
      $region35: #{tpu_custom_call.1} parent=5 // pred_region
        %s177 = ssub.s32 %s13, 1
        // Predicated region
        $region37: #{tpu_custom_call.1} parent=35 // pred_check
          %p178 = pneg %p76
        $region38: #{tpu_custom_call.1} parent=35 // pred_check_branch
          %180 = sbr.rel (%p178) target = $region40
        $region39: #{tpu_custom_call.1} parent=35 // pred_region
          %182 = dma.done [#allocation5], 1024
        $region40: #{tpu_custom_call.1} parent=35 // pred_fallthru
          _
        // Predicated region
        $region41: #{tpu_custom_call.1} parent=35 // pred_check
          %p183 = pneg %p97
        $region42: #{tpu_custom_call.1} parent=35 // pred_check_branch
          %185 = sbr.rel (%p183) target = $region44
        $region43: #{tpu_custom_call.1} parent=35 // pred_region
          %187 = dma.done [#allocation8], 1024
        $region44: #{tpu_custom_call.1} parent=35 // pred_fallthru
          _
        %p188 = pneg %p34
        %p189 = pneg %p31
        %p190 = pneg %p55
        %p191 = pneg %p52
        %p192 = pneg %p76
        %p193 = pneg %p73
        %p194 = pneg %p97
        %p195 = pneg %p94
        %p196 = pneg %p118
        %p197 = pneg %p115
        %p198 = scmp.eq.s32.totalorder %s18, 0
        // Predicated region
        $region45: #{tpu_custom_call.1} parent=35 // pred_check
          %p199 = pneg %p198
        $region46: #{tpu_custom_call.1} parent=35 // pred_check_branch
          %201 = sbr.rel (%p199) target = $region48
        $region47: #{tpu_custom_call.1} parent=35 // pred_region
          %v202 = vld [vmem:[%s0] sm:$0xff]
          %203 = vst [vmem:[#allocation2] sm:$0xff] %v202
          %v204 = vld [vmem:[%s1] sm:$0xff]
          %vm205 = vcmask 7168
          %206 = vst.msk [vmem:[#allocation3] sm:$0xff] %vm205, %v204
        $region48: #{tpu_custom_call.1} parent=35 // pred_fallthru
          _
        %v207 = vld [vmem:[#allocation3] sm:$0xff]
        %v208 = vmax.f32 %v207, 1.0
        %v209 = vrcp.pop %v208
        %v210 = vmul.f32 %v208, %v209
        %v211 = vsub.f32 1.0, %v210
        %v212 = vmul.f32 %v209, %v211
        %v213 = vadd.f32 %v209, %v212
        %vm214 = vweird.f32 %v208
        %vm215 = vweird.f32 %v209
        %vm216 = vmor %vm214, %vm215
        %v217 = vsel %vm216, %v209, %v213
        %v218 = vand.u32 2147483647, %v208
        %vm219 = vcmp.eq.f32.partialorder %v218, 8.507059e+37
        %v220 = vand.u32 %v208, 2147483648
        %v221 = vor.u32 1.1754944e-38, %v220
        %v222 = vsel %vm219, %v221, %v217
        %v223 = vld [vmem:[#allocation2] sm:$0xff]
        %225 = vset.pattern.permute.xlu0 0
        %226 = vperm.xlu0 %225, %v222
        %v227 = vpop.permute.xlu0 %226
        %v229 = vmul.f32 %v223, %v227
        %v230 = vpack.c.bf16 %v229, %v229
        %v231 = vld [vmem:[#allocation7] sm:$0xf]
        %v232 = vld [vmem:[#allocation7 + $0x4] sm:$0xf]
        %v233 = vld [vmem:[#allocation7 + $0x8] sm:$0xf]
        %v234 = vld [vmem:[#allocation7 + $0xc] sm:$0xf]
        %v235 = vld [vmem:[#allocation7 + $0x10] sm:$0xf]
        %v236 = vld [vmem:[#allocation7 + $0x14] sm:$0xf]
        %v237 = vld [vmem:[#allocation7 + $0x18] sm:$0xf]
        %v238 = vld [vmem:[#allocation7 + $0x1c] sm:$0xf]
        %v239 = vld [vmem:[#allocation7 + $0x20] sm:$0xf]
        %v240 = vld [vmem:[#allocation7 + $0x24] sm:$0xf]
        %v241 = vld [vmem:[#allocation7 + $0x28] sm:$0xf]
        %v242 = vld [vmem:[#allocation7 + $0x2c] sm:$0xf]
        %v243 = vld [vmem:[#allocation7 + $0x30] sm:$0xf]
        %v244 = vld [vmem:[#allocation7 + $0x34] sm:$0xf]
        %v245 = vld [vmem:[#allocation7 + $0x38] sm:$0xf]
        %v246 = vld [vmem:[#allocation7 + $0x3c] sm:$0xf]
        %v263 = vunpack.c.l.b16 %v231
        %v264 = vunpack.c.l.b16 %v232
        %v265 = vunpack.c.l.b16 %v233
        %v266 = vunpack.c.l.b16 %v234
        %v267 = vunpack.c.l.b16 %v235
        %v268 = vunpack.c.l.b16 %v236
        %v269 = vunpack.c.l.b16 %v237
        %v270 = vunpack.c.l.b16 %v238
        %v271 = vunpack.c.l.b16 %v239
        %v272 = vunpack.c.l.b16 %v240
        %v273 = vunpack.c.l.b16 %v241
        %v274 = vunpack.c.l.b16 %v242
        %v275 = vunpack.c.l.b16 %v243
        %v276 = vunpack.c.l.b16 %v244
        %v277 = vunpack.c.l.b16 %v245
        %v278 = vunpack.c.l.b16 %v246
        %v279 = vpack.c.b16 %v264, %v263
        %v280 = vpack.c.b16 %v266, %v265
        %v281 = vpack.c.b16 %v268, %v267
        %v282 = vpack.c.b16 %v270, %v269
        %v283 = vpack.c.b16 %v272, %v271
        %v284 = vpack.c.b16 %v274, %v273
        %v285 = vpack.c.b16 %v276, %v275
        %v286 = vpack.c.b16 %v278, %v277
        %295 = vmatpush.bf16.msra.mxu0 %v286
        %296 = vmatpush.bf16.msra.mxu0 %v285
        %297 = vmatpush.bf16.msra.mxu0 %v284
        %298 = vmatpush.bf16.msra.mxu0 %v283
        %299 = vmatpush.bf16.msra.mxu0 %v282
        %300 = vmatpush.bf16.msra.mxu0 %v281
        %301 = vmatpush.bf16.msra.mxu0 %v280
        %302 = vmatpush.bf16.msra.mxu0 %v279
        %303 = vmatmul.bf16.gmra.mxu0 %v230
        %v304 = vpop.f32.mrf.mxu0
        %v305 = vadd.f32 0.0, %v304
        %v306 = vpop.f32.mrf.mxu0
        %307 = vdwg.mxu0
        %308 = vmax.index.xlane.f32.xlu0 %v305
        %v309 = vpop.xlane.xlu0 %308
        %s310 = smul.u32 %s18, 8
        %s311 = scalar_lea.vmem [#allocation9], %s310
        %312 = vst [vmem:[%s311] sm:$0xff] %v309
        %v313 = vlaneseq
        %v314 = vand.u32 %v313, 127
        %vm315 = vcmp.eq.s32.totalorder %v309, %v314
        %v316 = vsel %vm315, 1, 0
        %v317 = vcvt.s32.f32 %v316
        %v318 = vpack.c.bf16 %v317, %v317
        %v319 = vld [vmem:[#allocation2] sm:$0xff]
        %v320 = vld [vmem:[#allocation4] sm:$0xf]
        %v321 = vld [vmem:[#allocation4 + $0x4] sm:$0xf]
        %v322 = vld [vmem:[#allocation4 + $0x8] sm:$0xf]
        %v323 = vld [vmem:[#allocation4 + $0xc] sm:$0xf]
        %v324 = vld [vmem:[#allocation4 + $0x10] sm:$0xf]
        %v325 = vld [vmem:[#allocation4 + $0x14] sm:$0xf]
        %v326 = vld [vmem:[#allocation4 + $0x18] sm:$0xf]
        %v327 = vld [vmem:[#allocation4 + $0x1c] sm:$0xf]
        %v328 = vld [vmem:[#allocation4 + $0x20] sm:$0xf]
        %v329 = vld [vmem:[#allocation4 + $0x24] sm:$0xf]
        %v330 = vld [vmem:[#allocation4 + $0x28] sm:$0xf]
        %v331 = vld [vmem:[#allocation4 + $0x2c] sm:$0xf]
        %v332 = vld [vmem:[#allocation4 + $0x30] sm:$0xf]
        %v333 = vld [vmem:[#allocation4 + $0x34] sm:$0xf]
        %v334 = vld [vmem:[#allocation4 + $0x38] sm:$0xf]
        %v335 = vld [vmem:[#allocation4 + $0x3c] sm:$0xf]
        %v352 = vunpack.c.l.b16 %v320
        %v353 = vunpack.c.l.b16 %v321
        %v354 = vunpack.c.l.b16 %v322
        %v355 = vunpack.c.l.b16 %v323
        %v356 = vunpack.c.l.b16 %v324
        %v357 = vunpack.c.l.b16 %v325
        %v358 = vunpack.c.l.b16 %v326
        %v359 = vunpack.c.l.b16 %v327
        %v360 = vunpack.c.l.b16 %v328
        %v361 = vunpack.c.l.b16 %v329
        %v362 = vunpack.c.l.b16 %v330
        %v363 = vunpack.c.l.b16 %v331
        %v364 = vunpack.c.l.b16 %v332
        %v365 = vunpack.c.l.b16 %v333
        %v366 = vunpack.c.l.b16 %v334
        %v367 = vunpack.c.l.b16 %v335
        %v368 = vpack.c.b16 %v353, %v352
        %v369 = vpack.c.b16 %v355, %v354
        %v370 = vpack.c.b16 %v357, %v356
        %v371 = vpack.c.b16 %v359, %v358
        %v372 = vpack.c.b16 %v361, %v360
        %v373 = vpack.c.b16 %v363, %v362
        %v374 = vpack.c.b16 %v365, %v364
        %v375 = vpack.c.b16 %v367, %v366
        %384 = vmatpush.bf16.msra.mxu0 %v375
        %385 = vmatpush.bf16.msra.mxu0 %v374
        %386 = vmatpush.bf16.msra.mxu0 %v373
        %387 = vmatpush.bf16.msra.mxu0 %v372
        %388 = vmatpush.bf16.msra.mxu0 %v371
        %389 = vmatpush.bf16.msra.mxu0 %v370
        %390 = vmatpush.bf16.msra.mxu0 %v369
        %391 = vmatpush.bf16.msra.mxu0 %v368
        %392 = vmatmul.bf16.gmra.mxu0 %v318
        %v393 = vpop.f32.mrf.mxu0
        %v394 = vadd.f32 0.0, %v393
        %v395 = vpop.f32.mrf.mxu0
        %396 = vdwg.mxu0
        %v397 = vadd.f32 %v319, %v394
        %398 = vst [vmem:[#allocation2] sm:$0xff] %v397
        %v399 = vld [vmem:[#allocation3] sm:$0xff]
        %v400 = vadd.f32 %v399, 1.0
        %vm401 = vcmask 7168
        %402 = vst.msk [vmem:[#allocation3] sm:$0xff] %vm401, %v400
        // Predicated region
        $region49: #{tpu_custom_call.1} parent=35 // pred_check
          %p403 = pneg %p115
        $region50: #{tpu_custom_call.1} parent=35 // pred_check_branch
          %405 = sbr.rel (%p403) target = $region52
        $region51: #{tpu_custom_call.1} parent=35 // pred_region
          %407 = vsyncadd [#allocation6], 0
          %s408 = sshll.u32 [#allocation9], 4
          %s409 = int_to_ptr.vmem [resolvable:$true] %s408
          %s410 = sshll.u32 %s4, 4
          %s411 = int_to_ptr.hbm [resolvable:$true] %s410
          %416 = dma.vmem_to_hbm [thread:$0]  %s409, 512, %s411, [#allocation6], 128, 128, 8
        $region52: #{tpu_custom_call.1} parent=35 // pred_fallthru
          _
        // Predicated region
        $region53: #{tpu_custom_call.1} parent=35 // pred_check
          %p417 = pneg %p115
        $region54: #{tpu_custom_call.1} parent=35 // pred_check_branch
          %419 = sbr.rel (%p417) target = $region56
        $region55: #{tpu_custom_call.1} parent=35 // pred_region
          %421 = dma.done [#allocation6], 512
        $region56: #{tpu_custom_call.1} parent=35 // pred_fallthru
          _
      $region36: #{tpu_custom_call.1} parent=5 // pred_fallthru
        _
      %p422 = scmp.le.s32.totalorder 2, %s13
      // Predicated region
      $region57: #{tpu_custom_call.1} parent=5 // pred_check
        %p423 = pneg %p422
      $region58: #{tpu_custom_call.1} parent=5 // pred_check_branch
        %425 = sbr.rel (%p423) target = $region60
      $region59: #{tpu_custom_call.1} parent=5 // pred_region
        %s426 = ssub.s32 %s13, 2
      $region60: #{tpu_custom_call.1} parent=5 // pred_fallthru
        _
    $region6: #{tpu_custom_call.1} parent=1 // loop_footer
      %s17 = sadd.s32 1, %s13
    $region7: #{tpu_custom_call.1} parent=1 // loop_footer_branch
      %12 = sbr.rel target = $region3
    $region8: #{tpu_custom_call.1} parent=1 // loop_exit
      _
    %427 = vsyncpa [#allocation5], 1
    %s428 = scalar_lea.sflag [#allocation5], 1
    %429 = vsyncpa %s428, 1
    %430 = vsyncpa [#allocation8], 1
    %431 = vsyncpa [#allocation6], 1
    %s432 = scalar_lea.sflag [#allocation6], 1
    %433 = vsyncpa %s432, 1

// kernel: tpu_custom_call.1
$region0: #{tpu_custom_call.1}
  #allocation0 [shape = 'u32[]', space=smem, size = 0x4, offset = 0x4, fixed_abs, tag = 'smem constant byte address 0x4 - core index']
  #allocation1 [shape = 'u32[72,128]{1,0:T(1,128)}', space=vmem, size = 0x9000, scoped, tag = 'internal scratch']
  #allocation2 [shape = 'f32[8,128]{1,0:T(8,128)}', space=vmem, size = 0x1000, scoped, tag = 'scratch operand']
  #allocation3 [shape = 'f32[8,1]{1,0:T(8,128)}', space=vmem, size = 0x1000, scoped, tag = 'scratch operand']
  %s0 = inlined_call_operand.vmem [shape: f32[8,128], index: 0, kind: input, shape index: {}]
  %s1 = inlined_call_operand.vmem [shape: f32[8,1], index: 1, kind: input, shape index: {}]
  %s2 = inlined_call_operand.hbm [shape: bf16[128,128], index: 2, kind: input, shape index: {}]
  %s3 = inlined_call_operand.hbm [shape: bf16[128,128], index: 3, kind: input, shape index: {}]
  %s4 = inlined_call_operand.hbm [shape: s32[4,8,128], index: 4, kind: output, shape index: {}]
  %s5 = sld [smem:[#allocation0]]
  $region61: #{tpu_custom_call.1} parent=0
    _
  %s7 = ssub.s32 1, %s5
  %s8 = scalar_select 0, %s7, %s5
  $region1: #{tpu_custom_call.1} parent=0
    #allocation4 [shape = 'u8[32768]{0}', space=vmem, size = 0x8000, scoped, tag = 'input window, operand 2, single buffered']
    #allocation5 [shape = 's32[2]{0}', space=sflag, size = 0x8, scoped, tag = 'scoped memory for tpu_custom_call.1']
    #allocation6 [shape = 's32[2]{0}', space=sflag, size = 0x8, scoped, tag = 'scoped memory for tpu_custom_call.1']
    #allocation7 [shape = 'u8[32768]{0}', space=vmem, size = 0x8000, scoped, tag = 'input window, operand 3, single buffered']
    #allocation8 [shape = 's32[1]{0}', space=sflag, size = 0x4, scoped, tag = 'scoped memory for tpu_custom_call.1']
    #allocation9 [shape = 'u8[16384]{0}', space=vmem, size = 0x4000, scoped, tag = 'output window, operand 0, single buffered']
    %9 = vsyncpa [#allocation5], 0
    %10 = vsyncpa [#allocation8], 0
    %11 = vsyncpa [#allocation6], 0
    loop: start=0, step=1, limit=6
    $region2: #{tpu_custom_call.1} parent=1 // loop_pre_header
      _
    $region3: #{tpu_custom_call.1} parent=1 // loop_header
      %s13 = sphi 0, %s17
      %p14 = scmp.ge.s32.totalorder %s13, 6
      %s21 = sphi 0, %s21
      %s23 = sphi 0, %s21
      %s24 = sphi 0, %s23
      %s38 = sphi 0, %s24
      %s42 = sphi 0, %s42
      %s44 = sphi 0, %s42
      %s45 = sphi 0, %s44
      %s59 = sphi 0, %s45
      %s63 = sphi 0, %s63
      %s65 = sphi 0, %s63
      %s66 = sphi 0, %s65
      %s80 = sphi 0, %s66
      %s84 = sphi 0, %s84
      %s86 = sphi 0, %s84
      %s87 = sphi 0, %s86
      %s101 = sphi 0, %s87
      %s105 = sphi 0, %s105
      %s107 = sphi 0, %s105
      %s108 = sphi 0, %s107
      %s122 = sphi 0, %s108
    $region4: #{tpu_custom_call.1} parent=1 // loop_header_branch
      %16 = sbr.rel (%p14) target = $region8
    $region5: #{tpu_custom_call.1} parent=1 // loop_body
      %s18 = ssub.s32 %s13, 1
      %s19 = ssub.s32 %s13, 2
      %s20 = sadd.s32 %s13, 1
      %s22 = sadd.s32 %s21, 1
      %p25 = scmp.eq.s32.totalorder %s13, 3
      %p26 = scmp.ne.s32.totalorder %s21, %s23
      %p27 = scmp.eq.s32.totalorder %s13, 0
      %p28 = por %p26, %p27
      %p29 = scmp.ne.s32.totalorder %s21, %s23
      %p30 = scmp.eq.s32.totalorder %s18, 3
      %p31 = por %p29, %p30
      %p32 = scmp.ne.s32.totalorder %s23, %s24
      %p33 = scmp.eq.s32.totalorder %s18, 0
      %p34 = por %p32, %p33
      %p35 = scmp.ne.s32.totalorder %s23, %s24
      %p36 = scmp.eq.s32.totalorder %s19, 3
      %p37 = por %p35, %p36
      %p39 = scmp.ne.s32.totalorder %s24, %s38
      %p40 = scmp.eq.s32.totalorder %s19, 0
      %p41 = por %p39, %p40
      %s43 = sadd.s32 %s42, 1
      %p46 = scmp.eq.s32.totalorder %s13, 3
      %p47 = scmp.ne.s32.totalorder %s42, %s44
      %p48 = scmp.eq.s32.totalorder %s13, 0
      %p49 = por %p47, %p48
      %p50 = scmp.ne.s32.totalorder %s42, %s44
      %p51 = scmp.eq.s32.totalorder %s18, 3
      %p52 = por %p50, %p51
      %p53 = scmp.ne.s32.totalorder %s44, %s45
      %p54 = scmp.eq.s32.totalorder %s18, 0
      %p55 = por %p53, %p54
      %p56 = scmp.ne.s32.totalorder %s44, %s45
      %p57 = scmp.eq.s32.totalorder %s19, 3
      %p58 = por %p56, %p57
      %p60 = scmp.ne.s32.totalorder %s45, %s59
      %p61 = scmp.eq.s32.totalorder %s19, 0
      %p62 = por %p60, %p61
      %s64 = sadd.s32 %s63, 1
      %p67 = scmp.eq.s32.totalorder %s13, 3
      %p68 = scmp.ne.s32.totalorder %s63, %s65
      %p69 = scmp.eq.s32.totalorder %s13, 0
      %p70 = por %p68, %p69
      %p71 = scmp.ne.s32.totalorder %s63, %s65
      %p72 = scmp.eq.s32.totalorder %s18, 3
      %p73 = por %p71, %p72
      %p74 = scmp.ne.s32.totalorder %s65, %s66
      %p75 = scmp.eq.s32.totalorder %s18, 0
      %p76 = por %p74, %p75
      %p77 = scmp.ne.s32.totalorder %s65, %s66
      %p78 = scmp.eq.s32.totalorder %s19, 3
      %p79 = por %p77, %p78
      %p81 = scmp.ne.s32.totalorder %s66, %s80
      %p82 = scmp.eq.s32.totalorder %s19, 0
      %p83 = por %p81, %p82
      %s85 = sadd.s32 %s84, 1
      %p88 = scmp.eq.s32.totalorder %s13, 3
      %p89 = scmp.ne.s32.totalorder %s84, %s86
      %p90 = scmp.eq.s32.totalorder %s13, 0
      %p91 = por %p89, %p90
      %p92 = scmp.ne.s32.totalorder %s84, %s86
      %p93 = scmp.eq.s32.totalorder %s18, 3
      %p94 = por %p92, %p93
      %p95 = scmp.ne.s32.totalorder %s86, %s87
      %p96 = scmp.eq.s32.totalorder %s18, 0
      %p97 = por %p95, %p96
      %p98 = scmp.ne.s32.totalorder %s86, %s87
      %p99 = scmp.eq.s32.totalorder %s19, 3
      %p100 = por %p98, %p99
      %p102 = scmp.ne.s32.totalorder %s87, %s101
      %p103 = scmp.eq.s32.totalorder %s19, 0
      %p104 = por %p102, %p103
      %s106 = sadd.s32 %s105, 1
      %p109 = scmp.eq.s32.totalorder %s13, 3
      %p110 = scmp.ne.s32.totalorder %s105, %s107
      %p111 = scmp.eq.s32.totalorder %s13, 0
      %p112 = por %p110, %p111
      %p113 = scmp.ne.s32.totalorder %s105, %s107
      %p114 = scmp.eq.s32.totalorder %s18, 3
      %p115 = por %p113, %p114
      %p116 = scmp.ne.s32.totalorder %s107, %s108
      %p117 = scmp.eq.s32.totalorder %s18, 0
      %p118 = por %p116, %p117
      %p119 = scmp.ne.s32.totalorder %s107, %s108
      %p120 = scmp.eq.s32.totalorder %s19, 3
      %p121 = por %p119, %p120
      %p123 = scmp.ne.s32.totalorder %s108, %s122
      %p124 = scmp.eq.s32.totalorder %s19, 0
      %p125 = por %p123, %p124
      %p126 = scmp.le.s32.totalorder 1, %s13
      %p127 = scmp.lt.s32.totalorder %s13, 5
      %p128 = pnand %p126, %p127
      %p129 = pneg %p128
      // Predicated region
      $region9: #{tpu_custom_call.1} parent=5 // pred_check
        _
      $region10: #{tpu_custom_call.1} parent=5 // pred_check_branch
        %131 = sbr.rel (%p128) target = $region12
      $region11: #{tpu_custom_call.1} parent=5 // pred_region
        %s132 = ssub.s32 %s13, 1
        // Predicated region
        $region13: #{tpu_custom_call.1} parent=11 // pred_check
          %p133 = pneg %p34
        $region14: #{tpu_custom_call.1} parent=11 // pred_check_branch
          %135 = sbr.rel (%p133) target = $region16
        $region15: #{tpu_custom_call.1} parent=11 // pred_region
          _
        $region16: #{tpu_custom_call.1} parent=11 // pred_fallthru
          _
        // Predicated region
        $region17: #{tpu_custom_call.1} parent=11 // pred_check
          %p136 = pneg %p55
        $region18: #{tpu_custom_call.1} parent=11 // pred_check_branch
          %138 = sbr.rel (%p136) target = $region20
        $region19: #{tpu_custom_call.1} parent=11 // pred_region
          _
        $region20: #{tpu_custom_call.1} parent=11 // pred_fallthru
          _
        // Predicated region
        $region21: #{tpu_custom_call.1} parent=11 // pred_check
          %p139 = pneg %p76
        $region22: #{tpu_custom_call.1} parent=11 // pred_check_branch
          %141 = sbr.rel (%p139) target = $region24
        $region23: #{tpu_custom_call.1} parent=11 // pred_region
          %143 = vsyncadd [#allocation5], 0
          %s144 = sshll.u32 %s2, 4
          %s145 = int_to_ptr.hbm [resolvable:$true] %s144
          %s146 = sshll.u32 [#allocation4], 4
          %s147 = int_to_ptr.vmem [resolvable:$true] %s146
          %152 = dma.hbm_to_vmem [thread:$0]  %s145, 1024, %s147, [#allocation5], 64, 64, 4
        $region24: #{tpu_custom_call.1} parent=11 // pred_fallthru
          _
        // Predicated region
        $region25: #{tpu_custom_call.1} parent=11 // pred_check
          %p153 = pneg %p97
        $region26: #{tpu_custom_call.1} parent=11 // pred_check_branch
          %155 = sbr.rel (%p153) target = $region28
        $region27: #{tpu_custom_call.1} parent=11 // pred_region
          %157 = vsyncadd [#allocation8], 0
          %s158 = sshll.u32 %s3, 4
          %s159 = int_to_ptr.hbm [resolvable:$true] %s158
          %s160 = sshll.u32 [#allocation7], 4
          %s161 = int_to_ptr.vmem [resolvable:$true] %s160
          %166 = dma.hbm_to_vmem [thread:$0]  %s159, 1024, %s161, [#allocation8], 64, 64, 4
        $region28: #{tpu_custom_call.1} parent=11 // pred_fallthru
          _
      $region12: #{tpu_custom_call.1} parent=5 // pred_fallthru
        _
      %p167 = scmp.lt.s32.totalorder %s13, 4
      // Predicated region
      $region29: #{tpu_custom_call.1} parent=5 // pred_check
        %p168 = pneg %p167
      $region30: #{tpu_custom_call.1} parent=5 // pred_check_branch
        %170 = sbr.rel (%p168) target = $region32
      $region31: #{tpu_custom_call.1} parent=5 // pred_region
        _
      $region32: #{tpu_custom_call.1} parent=5 // pred_fallthru
        _
      %p171 = scmp.le.s32.totalorder 1, %s13
      %p172 = scmp.lt.s32.totalorder %s13, 5
      %p173 = pnand %p171, %p172
      %p174 = pneg %p173
      // Predicated region
      $region33: #{tpu_custom_call.1} parent=5 // pred_check
        _
      $region34: #{tpu_custom_call.1} parent=5 // pred_check_branch
        %176 = sbr.rel (%p173) target = $region36
      $region35: #{tpu_custom_call.1} parent=5 // pred_region
        %s177 = ssub.s32 %s13, 1
        // Predicated region
        $region37: #{tpu_custom_call.1} parent=35 // pred_check
          %p178 = pneg %p76
        $region38: #{tpu_custom_call.1} parent=35 // pred_check_branch
          %180 = sbr.rel (%p178) target = $region40
        $region39: #{tpu_custom_call.1} parent=35 // pred_region
          %182 = dma.done [#allocation5], 1024
        $region40: #{tpu_custom_call.1} parent=35 // pred_fallthru
          _
        // Predicated region
        $region41: #{tpu_custom_call.1} parent=35 // pred_check
          %p183 = pneg %p97
        $region42: #{tpu_custom_call.1} parent=35 // pred_check_branch
          %185 = sbr.rel (%p183) target = $region44
        $region43: #{tpu_custom_call.1} parent=35 // pred_region
          %187 = dma.done [#allocation8], 1024
        $region44: #{tpu_custom_call.1} parent=35 // pred_fallthru
          _
        %p188 = pneg %p34
        %p189 = pneg %p31
        %p190 = pneg %p55
        %p191 = pneg %p52
        %p192 = pneg %p76
        %p193 = pneg %p73
        %p194 = pneg %p97
        %p195 = pneg %p94
        %p196 = pneg %p118
        %p197 = pneg %p115
        %p198 = scmp.eq.s32.totalorder %s18, 0
        // Predicated region
        $region45: #{tpu_custom_call.1} parent=35 // pred_check
          %p199 = pneg %p198
        $region46: #{tpu_custom_call.1} parent=35 // pred_check_branch
          %201 = sbr.rel (%p199) target = $region48
        $region47: #{tpu_custom_call.1} parent=35 // pred_region
          %v202 = vld [vmem:[%s0] sm:$0xff]
          %203 = vst [vmem:[#allocation2] sm:$0xff] %v202
          %v204 = vld [vmem:[%s1] sm:$0xff]
          %vm205 = vcmask 7168
          %206 = vst.msk [vmem:[#allocation3] sm:$0xff] %vm205, %v204
        $region48: #{tpu_custom_call.1} parent=35 // pred_fallthru
          _
        %v207 = vld [vmem:[#allocation3] sm:$0xff]
        %v208 = vmax.f32 %v207, 1.0
        %v209 = vrcp.pop %v208
        %v210 = vmul.f32 %v208, %v209
        %v211 = vsub.f32 1.0, %v210
        %v212 = vmul.f32 %v209, %v211
        %v213 = vadd.f32 %v209, %v212
        %vm214 = vweird.f32 %v208
        %vm215 = vweird.f32 %v209
        %vm216 = vmor %vm214, %vm215
        %v217 = vsel %vm216, %v209, %v213
        %v218 = vand.u32 2147483647, %v208
        %vm219 = vcmp.eq.f32.partialorder %v218, 8.507059e+37
        %v220 = vand.u32 %v208, 2147483648
        %v221 = vor.u32 1.1754944e-38, %v220
        %v222 = vsel %vm219, %v221, %v217
        %v223 = vld [vmem:[#allocation2] sm:$0xff]
        %225 = vset.pattern.permute.xlu0 0
        %226 = vperm.xlu0 %225, %v222
        %v227 = vpop.permute.xlu0 %226
        %v229 = vmul.f32 %v223, %v227
        %v230 = vpack.c.bf16 %v229, %v229
        %v231 = vld [vmem:[#allocation7] sm:$0xf]
        %v232 = vld [vmem:[#allocation7 + $0x4] sm:$0xf]
        %v233 = vld [vmem:[#allocation7 + $0x8] sm:$0xf]
        %v234 = vld [vmem:[#allocation7 + $0xc] sm:$0xf]
        %v235 = vld [vmem:[#allocation7 + $0x10] sm:$0xf]
        %v236 = vld [vmem:[#allocation7 + $0x14] sm:$0xf]
        %v237 = vld [vmem:[#allocation7 + $0x18] sm:$0xf]
        %v238 = vld [vmem:[#allocation7 + $0x1c] sm:$0xf]
        %v239 = vld [vmem:[#allocation7 + $0x20] sm:$0xf]
        %v240 = vld [vmem:[#allocation7 + $0x24] sm:$0xf]
        %v241 = vld [vmem:[#allocation7 + $0x28] sm:$0xf]
        %v242 = vld [vmem:[#allocation7 + $0x2c] sm:$0xf]
        %v243 = vld [vmem:[#allocation7 + $0x30] sm:$0xf]
        %v244 = vld [vmem:[#allocation7 + $0x34] sm:$0xf]
        %v245 = vld [vmem:[#allocation7 + $0x38] sm:$0xf]
        %v246 = vld [vmem:[#allocation7 + $0x3c] sm:$0xf]
        %v263 = vunpack.c.l.b16 %v231
        %v264 = vunpack.c.l.b16 %v232
        %v265 = vunpack.c.l.b16 %v233
        %v266 = vunpack.c.l.b16 %v234
        %v267 = vunpack.c.l.b16 %v235
        %v268 = vunpack.c.l.b16 %v236
        %v269 = vunpack.c.l.b16 %v237
        %v270 = vunpack.c.l.b16 %v238
        %v271 = vunpack.c.l.b16 %v239
        %v272 = vunpack.c.l.b16 %v240
        %v273 = vunpack.c.l.b16 %v241
        %v274 = vunpack.c.l.b16 %v242
        %v275 = vunpack.c.l.b16 %v243
        %v276 = vunpack.c.l.b16 %v244
        %v277 = vunpack.c.l.b16 %v245
        %v278 = vunpack.c.l.b16 %v246
        %v279 = vpack.c.b16 %v264, %v263
        %v280 = vpack.c.b16 %v266, %v265
        %v281 = vpack.c.b16 %v268, %v267
        %v282 = vpack.c.b16 %v270, %v269
        %v283 = vpack.c.b16 %v272, %v271
        %v284 = vpack.c.b16 %v274, %v273
        %v285 = vpack.c.b16 %v276, %v275
        %v286 = vpack.c.b16 %v278, %v277
        %295 = vmatpush.bf16.msra.mxu0 %v286
        %296 = vmatpush.bf16.msra.mxu0 %v285
        %297 = vmatpush.bf16.msra.mxu0 %v284
        %298 = vmatpush.bf16.msra.mxu0 %v283
        %299 = vmatpush.bf16.msra.mxu0 %v282
        %300 = vmatpush.bf16.msra.mxu0 %v281
        %301 = vmatpush.bf16.msra.mxu0 %v280
        %302 = vmatpush.bf16.msra.mxu0 %v279
        %303 = vmatmul.bf16.gmra.mxu0 %v230
        %v304 = vpop.f32.mrf.mxu0
        %v305 = vadd.f32 0.0, %v304
        %v306 = vpop.f32.mrf.mxu0
        %307 = vdwg.mxu0
        %308 = vmax.index.xlane.f32.xlu0 %v305
        %v309 = vpop.xlane.xlu0 %308
        %s310 = smul.u32 %s18, 8
        %s311 = scalar_lea.vmem [#allocation9], %s310
        %312 = vst [vmem:[%s311] sm:$0xff] %v309
        %v313 = vlaneseq
        %v314 = vand.u32 %v313, 127
        %vm315 = vcmp.eq.s32.totalorder %v309, %v314
        %v316 = vsel %vm315, 1, 0
        %v317 = vcvt.s32.f32 %v316
        %v318 = vpack.c.bf16 %v317, %v317
        %v319 = vld [vmem:[#allocation2] sm:$0xff]
        %v320 = vld [vmem:[#allocation4] sm:$0xf]
        %v321 = vld [vmem:[#allocation4 + $0x4] sm:$0xf]
        %v322 = vld [vmem:[#allocation4 + $0x8] sm:$0xf]
        %v323 = vld [vmem:[#allocation4 + $0xc] sm:$0xf]
        %v324 = vld [vmem:[#allocation4 + $0x10] sm:$0xf]
        %v325 = vld [vmem:[#allocation4 + $0x14] sm:$0xf]
        %v326 = vld [vmem:[#allocation4 + $0x18] sm:$0xf]
        %v327 = vld [vmem:[#allocation4 + $0x1c] sm:$0xf]
        %v328 = vld [vmem:[#allocation4 + $0x20] sm:$0xf]
        %v329 = vld [vmem:[#allocation4 + $0x24] sm:$0xf]
        %v330 = vld [vmem:[#allocation4 + $0x28] sm:$0xf]
        %v331 = vld [vmem:[#allocation4 + $0x2c] sm:$0xf]
        %v332 = vld [vmem:[#allocation4 + $0x30] sm:$0xf]
        %v333 = vld [vmem:[#allocation4 + $0x34] sm:$0xf]
        %v334 = vld [vmem:[#allocation4 + $0x38] sm:$0xf]
        %v335 = vld [vmem:[#allocation4 + $0x3c] sm:$0xf]
        %v352 = vunpack.c.l.b16 %v320
        %v353 = vunpack.c.l.b16 %v321
        %v354 = vunpack.c.l.b16 %v322
        %v355 = vunpack.c.l.b16 %v323
        %v356 = vunpack.c.l.b16 %v324
        %v357 = vunpack.c.l.b16 %v325
        %v358 = vunpack.c.l.b16 %v326
        %v359 = vunpack.c.l.b16 %v327
        %v360 = vunpack.c.l.b16 %v328
        %v361 = vunpack.c.l.b16 %v329
        %v362 = vunpack.c.l.b16 %v330
        %v363 = vunpack.c.l.b16 %v331
        %v364 = vunpack.c.l.b16 %v332
        %v365 = vunpack.c.l.b16 %v333
        %v366 = vunpack.c.l.b16 %v334
        %v367 = vunpack.c.l.b16 %v335
        %v368 = vpack.c.b16 %v353, %v352
        %v369 = vpack.c.b16 %v355, %v354
        %v370 = vpack.c.b16 %v357, %v356
        %v371 = vpack.c.b16 %v359, %v358
        %v372 = vpack.c.b16 %v361, %v360
        %v373 = vpack.c.b16 %v363, %v362
        %v374 = vpack.c.b16 %v365, %v364
        %v375 = vpack.c.b16 %v367, %v366
        %384 = vmatpush.bf16.msra.mxu0 %v375
        %385 = vmatpush.bf16.msra.mxu0 %v374
        %386 = vmatpush.bf16.msra.mxu0 %v373
        %387 = vmatpush.bf16.msra.mxu0 %v372
        %388 = vmatpush.bf16.msra.mxu0 %v371
        %389 = vmatpush.bf16.msra.mxu0 %v370
        %390 = vmatpush.bf16.msra.mxu0 %v369
        %391 = vmatpush.bf16.msra.mxu0 %v368
        %392 = vmatmul.bf16.gmra.mxu0 %v318
        %v393 = vpop.f32.mrf.mxu0
        %v394 = vadd.f32 0.0, %v393
        %v395 = vpop.f32.mrf.mxu0
        %396 = vdwg.mxu0
        %v397 = vadd.f32 %v319, %v394
        %398 = vst [vmem:[#allocation2] sm:$0xff] %v397
        %v399 = vld [vmem:[#allocation3] sm:$0xff]
        %v400 = vadd.f32 %v399, 1.0
        %vm401 = vcmask 7168
        %402 = vst.msk [vmem:[#allocation3] sm:$0xff] %vm401, %v400
        // Predicated region
        $region49: #{tpu_custom_call.1} parent=35 // pred_check
          %p403 = pneg %p115
        $region50: #{tpu_custom_call.1} parent=35 // pred_check_branch
          %405 = sbr.rel (%p403) target = $region52
        $region51: #{tpu_custom_call.1} parent=35 // pred_region
          %407 = vsyncadd [#allocation6], 0
          %s408 = sshll.u32 [#allocation9], 4
          %s409 = int_to_ptr.vmem [resolvable:$true] %s408
          %s410 = sshll.u32 %s4, 4
          %s411 = int_to_ptr.hbm [resolvable:$true] %s410
          %416 = dma.vmem_to_hbm [thread:$0]  %s409, 512, %s411, [#allocation6], 128, 128, 8
        $region52: #{tpu_custom_call.1} parent=35 // pred_fallthru
          _
        // Predicated region
        $region53: #{tpu_custom_call.1} parent=35 // pred_check
          %p417 = pneg %p115
        $region54: #{tpu_custom_call.1} parent=35 // pred_check_branch
          %419 = sbr.rel (%p417) target = $region56
        $region55: #{tpu_custom_call.1} parent=35 // pred_region
          %421 = dma.done [#allocation6], 512
        $region56: #{tpu_custom_call.1} parent=35 // pred_fallthru
          _
      $region36: #{tpu_custom_call.1} parent=5 // pred_fallthru
        _
      %p422 = scmp.le.s32.totalorder 2, %s13
      // Predicated region
      $region57: #{tpu_custom_call.1} parent=5 // pred_check
        %p423 = pneg %p422
      $region58: #{tpu_custom_call.1} parent=5 // pred_check_branch
        %425 = sbr.rel (%p423) target = $region60
      $region59: #{tpu_custom_call.1} parent=5 // pred_region
        %s426 = ssub.s32 %s13, 2
      $region60: #{tpu_custom_call.1} parent=5 // pred_fallthru
        _
    $region6: #{tpu_custom_call.1} parent=1 // loop_footer
      %s17 = sadd.s32 1, %s13
    $region7: #{tpu_custom_call.1} parent=1 // loop_footer_branch
      %12 = sbr.rel target = $region3
    $region8: #{tpu_custom_call.1} parent=1 // loop_exit
      _
    %427 = vsyncpa [#allocation5], 1
    %s428 = scalar_lea.sflag [#allocation5], 1
    %429 = vsyncpa %s428, 1
    %430 = vsyncpa [#allocation8], 1
    %431 = vsyncpa [#allocation6], 1
    %s432 = scalar_lea.sflag [#allocation6], 1
    %433 = vsyncpa %s432, 1

</llo_original>
